<compile_context>
chip_gen: v5e
topology: v5e:2x2
jax: 0.10.0
libtpu: 0.0.40
codegen_flags: <defaults>
</compile_context>

<pallas_src>
import functools

import numpy as np
import jax
import jax.numpy as jnp
from jax import lax
from jax.experimental import pallas as pl
from jax.experimental.pallas import tpu as pltpu

_LANE = 128
_MAX_LANE_TILE = 2048
_BLOCK_BYTES_TARGET = 8 * 1024 * 1024  # per-block working-set target (v7x safe)


def _cdiv(a, b):
    return (a + b - 1) // b


def _round_up(a, b):
    return _cdiv(a, b) * b


def _tap_count_matrix(L, k, pad, out_len):
    """W[t, j] = how many taps of output window t read x[j] (edge replication
    folded into the first/last columns).  Small integers, exact in bf16."""
    pos = np.clip(np.arange(out_len)[:, None] - pad + np.arange(k)[None, :], 0, L - 1)
    rows = np.broadcast_to(np.arange(out_len)[:, None], pos.shape)
    W = np.zeros((out_len, L), np.float32)
    np.add.at(W, (rows, pos), 1.0)
    return W


def _pick_lane_tile(n_lanes, bytes_per_lane_col, other_grid):
    """Largest multiple-of-128 lane tile that keeps the per-block working set
    near _BLOCK_BYTES_TARGET, while leaving >= 2 grid blocks when possible."""
    if n_lanes <= _LANE:
        return int(n_lanes)  # single (possibly sub-128) block == full lane dim
    by_budget = max(_LANE, (_BLOCK_BYTES_TARGET // max(bytes_per_lane_col, 1))
                    // _LANE * _LANE)
    tile = int(min(by_budget, _MAX_LANE_TILE, _round_up(n_lanes, _LANE)))
    if other_grid * _cdiv(n_lanes, tile) < 2:
        tile = max(_LANE, _round_up(_cdiv(n_lanes, 2), _LANE))
    return int(tile)


def _decomp_kernel(*refs, inv_k, precision, with_residual):
    # refs: (w_ref, x_ref, trend_ref[, res_ref])
    if with_residual:
        w_ref, x_ref, t_ref, r_ref = refs
    else:
        w_ref, x_ref, t_ref = refs
        r_ref = None
    x = x_ref[...]
    # (out_len, L) @ (L, lane_tile) on the MXU; accumulate in f32.
    trend = jnp.dot(w_ref[...], x, precision=precision,
                    preferred_element_type=jnp.float32) * inv_k
    t_ref[...] = trend.astype(t_ref.dtype)
    if r_ref is not None:
        r_ref[...] = (x.astype(jnp.float32) - trend).astype(r_ref.dtype)


def series_decomp(x, kernel_size, *, return_residual=False):
    """Trend (moving average) of x, matching the PyTorch series_decomp module.

    x: (B, L, C).  Returns trend (B, L_out, C); optionally also the seasonal
    residual x - trend (odd kernel_size only).
    """
    B, L, C = x.shape
    k = int(kernel_size)
    if k < 1:
        raise ValueError("kernel_size must be >= 1")
    pad = (k - 1) // 2
    out_len = L + 2 * pad - k + 1
    if return_residual and out_len != L:
        raise ValueError("residual output requires odd kernel_size (out_len == L)")
    if k == 1:
        return (x, jnp.zeros_like(x)) if return_residual else x

    dtype = x.dtype
    itemsize = dtype.itemsize
    W = jnp.asarray(_tap_count_matrix(L, k, pad, out_len), dtype=dtype)
    inv_k = 1.0 / k
    precision = (lax.Precision.HIGHEST if dtype == jnp.float32
                 else lax.Precision.DEFAULT)

    # Bytes per lane column: double-buffered in/out pipeline blocks + f32 temps.
    n_out = 2 if return_residual else 1
    col_bytes = 2 * (L + n_out * out_len) * itemsize + (L + 2 * out_len) * 4

    direct = (C % _LANE == 0) or (C >= _LANE)
    if direct:
        # Lane-dense path: no wrapper transpose/pad at all.
        lane_tile = _pick_lane_tile(C, col_bytes, B)
        grid = (B, _cdiv(C, lane_tile))
        w_spec = pl.BlockSpec((out_len, L), lambda b, c: (0, 0))
        x_spec = pl.BlockSpec((None, L, lane_tile), lambda b, c: (b, 0, c))
        t_spec = pl.BlockSpec((None, out_len, lane_tile), lambda b, c: (b, 0, c))
        r_spec = pl.BlockSpec((None, L, lane_tile), lambda b, c: (b, 0, c))
        x_in = x
        t_shape = jax.ShapeDtypeStruct((B, out_len, C), dtype)
        r_shape = jax.ShapeDtypeStruct((B, L, C), dtype)
        dims = ("parallel", "parallel")
    else:
        # Small C: fold (B, L, C) -> (L, B*C) so B*C fills the lane axis.
        # TODO(synk): hoist this fold to the model boundary (DLinear's per-channel
        # Linear over time wants a time-major layout anyway).
        N = B * C
        x_in = jnp.transpose(x, (1, 0, 2)).reshape(L, N)
        lane_tile = _pick_lane_tile(N, col_bytes, 1)
        grid = (_cdiv(N, lane_tile),)
        w_spec = pl.BlockSpec((out_len, L), lambda j: (0, 0))
        x_spec = pl.BlockSpec((L, lane_tile), lambda j: (0, j))
        t_spec = pl.BlockSpec((out_len, lane_tile), lambda j: (0, j))
        r_spec = pl.BlockSpec((L, lane_tile), lambda j: (0, j))
        t_shape = jax.ShapeDtypeStruct((out_len, N), dtype)
        r_shape = jax.ShapeDtypeStruct((L, N), dtype)
        dims = ("parallel",)

    out_shape = (t_shape, r_shape) if return_residual else t_shape
    out_specs = (t_spec, r_spec) if return_residual else t_spec

    x_bytes = B * L * C * itemsize
    o_bytes = (B * out_len * C + (B * L * C if return_residual else 0)) * itemsize
    cost = pl.CostEstimate(
        flops=2 * B * C * L * out_len,
        transcendentals=0,
        bytes_accessed=int(x_bytes + o_bytes + W.size * itemsize),
    )

    kernel = functools.partial(_decomp_kernel, inv_k=inv_k, precision=precision,
                               with_residual=return_residual)

    result = pl.pallas_call(
        kernel,
        out_shape=out_shape,
        grid_spec=pltpu.PrefetchScalarGridSpec(
            num_scalar_prefetch=0,
            grid=grid,
            in_specs=[w_spec, x_spec],
            out_specs=out_specs,
        ),
        compiler_params=pltpu.CompilerParams(
            dimension_semantics=dims,
            vmem_limit_bytes=64 * 1024 * 1024,
        ),
        cost_estimate=cost,
    )(W, x_in)

    if direct:
        return result

    # Unfold (T, B*C) -> (B, T, C).
    if return_residual:
        trend, res = result
        trend = trend.reshape(out_len, B, C).transpose(1, 0, 2)
        res = res.reshape(L, B, C).transpose(1, 0, 2)
        return trend, res
    return result.reshape(out_len, B, C).transpose(1, 0, 2)


def _reference(x, k):
    # Pure-JAX mirror of the PyTorch module.
    pad = (k - 1) // 2
    front = jnp.repeat(x[:, :1, :], pad, axis=1)
    end = jnp.repeat(x[:, -1:, :], pad, axis=1)
    xp = jnp.concatenate([front, x, end], axis=1)
    out_len = xp.shape[1] - k + 1
    acc = sum(xp[:, i:i + out_len, :] for i in range(k))
    return (acc / k).astype(x.dtype)


if __name__ == "__main__":
    key = jax.random.PRNGKey(0)
    # Small-C fold path and lane-dense direct path (C >= 128, no wrapper passes).
    x_small = jax.random.normal(key, (2, 48, 8), dtype=jnp.float32)
    x_wide = jax.random.normal(jax.random.fold_in(key, 1), (2, 48, 128),
                               dtype=jnp.float32)

    cases = (
        (x_small, (25, 5, 4)),   # k=25 DLinear default, k=5 small, k=4 even
        (x_wide, (25, 5)),
    )
    for x, ks in cases:
        for k in ks:
            trend = jax.block_until_ready(series_decomp(x, k))
            ref = _reference(x, k)
            assert trend.shape == ref.shape, (trend.shape, ref.shape)
            err = float(jnp.max(jnp.abs(trend - ref)))
            assert jnp.allclose(trend, ref, atol=2e-5, rtol=1e-4), (k, err)

    # Fused residual output (odd k only).
    trend, res = series_decomp(x_wide, 25, return_residual=True)
    jax.block_until_ready(res)
    ref_t = _reference(x_wide, 25)
    assert jnp.allclose(trend, ref_t, atol=2e-5, rtol=1e-4)
    assert jnp.allclose(res, x_wide - ref_t, atol=2e-5, rtol=1e-4)

    print("KERNEL_OK")
</pallas_src>

<mosaic_0001>
module attributes {stable_mosaic.version = 11 : i64} {
  func.func @_decomp_kernel(%arg0: i32, %arg1: memref<48x48xf32, #tpu.memory_space<vmem>>, %arg2: memref<48x16xf32, #tpu.memory_space<vmem>>, %arg3: memref<48x16xf32, #tpu.memory_space<vmem>>) attributes {dimension_semantics = [#tpu.dimension_semantics<parallel>], iteration_bounds = array<i64: 1>, scalar_prefetch = 0 : i64, scratch_operands = 0 : i64, tpu.core_type = #tpu.core_type<tc>, window_params = [{pipeline_mode = #tpu.pipeline_mode<synchronous>, transform_indices = @transform_0, window_bounds = array<i64: 48, 48>}, {transform_indices = @transform_1, window_bounds = array<i64: 48, 16>}, {transform_indices = @transform_2, window_bounds = array<i64: 48, 16>}]} {
    %c0 = arith.constant 0 : index
    %c0_0 = arith.constant 0 : index
    %0 = vector.load %arg2[%c0, %c0_0] : memref<48x16xf32, #tpu.memory_space<vmem>>, vector<48x16xf32>
    %c0_1 = arith.constant 0 : index
    %c0_2 = arith.constant 0 : index
    %1 = vector.load %arg1[%c0_1, %c0_2] : memref<48x48xf32, #tpu.memory_space<vmem>>, vector<48x48xf32>
    %cst = arith.constant dense<0.000000e+00> : vector<48x16xf32>
    %2 = tpu.matmul %1, %0, %cst {dimension_numbers = #tpu.dot_dimension_numbers<[1], [0], [0], [1], [0, 0, 1, 1], [], []>, precision = #tpu.contract_precision<fp32>} : vector<48x48xf32>, vector<48x16xf32>, vector<48x16xf32> -> vector<48x16xf32>
    %cst_3 = arith.constant 4.000000e-02 : f32
    %3 = vector.broadcast %cst_3 : f32 to vector<48x16xf32>
    %4 = arith.mulf %2, %3 : vector<48x16xf32>
    %c0_4 = arith.constant 0 : index
    %c0_5 = arith.constant 0 : index
    %5 = vector.load %arg3[%c0_4, %c0_5] : memref<48x16xf32, #tpu.memory_space<vmem>>, vector<48x16xf32>
    tpu.vector_store %arg3[%c0_4, %c0_5], %4 {strides = array<i32>} : memref<48x16xf32, #tpu.memory_space<vmem>>, vector<48x16xf32>,
    return
  }
  func.func @transform_0(%arg0: i32) -> (i32, i32) {
    %c0_i32 = arith.constant 0 : i32
    %c0_i32_0 = arith.constant 0 : i32
    %c0_i32_1 = arith.constant 0 : i32
    return %c0_i32, %c0_i32_0 : i32, i32
  }
  func.func @transform_1(%arg0: i32) -> (i32, i32) {
    %c0_i32 = arith.constant 0 : i32
    %c0_i32_0 = arith.constant 0 : i32
    return %c0_i32, %arg0 : i32, i32
  }
  func.func @transform_2(%arg0: i32) -> (i32, i32) {
    %c0_i32 = arith.constant 0 : i32
    %c0_i32_0 = arith.constant 0 : i32
    return %c0_i32, %arg0 : i32, i32
  }
}

</mosaic_0001>

<llo_original>
// kernel: tpu_custom_call.1
$region0: #{tpu_custom_call.1}
  #allocation0 [shape = 'u32[]', space=smem, size = 0x4, offset = 0x4, fixed_abs, tag = 'smem constant byte address 0x4 - core index']
  #allocation1 [shape = 'u32[72,128]{1,0:T(1,128)}', space=vmem, size = 0x9000, scoped, tag = 'internal scratch']
  %s0 = inlined_call_operand.vmem [shape: f32[48,48], index: 0, kind: input, shape index: {}]
  %s1 = inlined_call_operand.vmem [shape: f32[48,16], index: 1, kind: input, shape index: {}]
  %s2 = inlined_call_operand.vmem [shape: f32[48,16], index: 2, kind: output, shape index: {}]
  %s3 = sld [smem:[#allocation0]]
  $region18: #{tpu_custom_call.1} parent=0
    _
  %s5 = ssub.s32 1, %s3
  %s6 = scalar_select 0, %s5, %s3
  // Predicated region
  $region2: #{tpu_custom_call.1} parent=0 // pred_check
    _
  $region3: #{tpu_custom_call.1} parent=0 // pred_check_branch
    %8 = sbr.rel (0) target = $region5
  $region4: #{tpu_custom_call.1} parent=0 // pred_region
    _
  $region5: #{tpu_custom_call.1} parent=0 // pred_fallthru
    _
  // Predicated region
  $region6: #{tpu_custom_call.1} parent=0 // pred_check
    _
  $region7: #{tpu_custom_call.1} parent=0 // pred_check_branch
    %10 = sbr.rel (0) target = $region9
  $region8: #{tpu_custom_call.1} parent=0 // pred_region
    _
  $region9: #{tpu_custom_call.1} parent=0 // pred_fallthru
    _
  %v11 = vld [vmem:[%s1] sm:$0xff]
  %v12 = vld [vmem:[%s1 + $0x8] sm:$0xff]
  %v13 = vld [vmem:[%s1 + $0x10] sm:$0xff]
  %v14 = vld [vmem:[%s1 + $0x18] sm:$0xff]
  %v15 = vld [vmem:[%s1 + $0x20] sm:$0xff]
  %v16 = vld [vmem:[%s1 + $0x28] sm:$0xff]
  %v17 = vld [vmem:[%s0] sm:$0xff]
  %v18 = vld [vmem:[%s0 + $0x8] sm:$0xff]
  %v19 = vld [vmem:[%s0 + $0x10] sm:$0xff]
  %v20 = vld [vmem:[%s0 + $0x18] sm:$0xff]
  %v21 = vld [vmem:[%s0 + $0x20] sm:$0xff]
  %v22 = vld [vmem:[%s0 + $0x28] sm:$0xff]
  %vm23 = vcmask 392192
  %v25 = vsel %vm23, %v17, 0
  %v28 = vsel %vm23, %v18, 0
  %v31 = vsel %vm23, %v19, 0
  %v34 = vsel %vm23, %v20, 0
  %v37 = vsel %vm23, %v21, 0
  %v40 = vsel %vm23, %v22, 0
  %42 = vmatpush.msra.mxu0 0.0
  %43 = vmatpush.msra.mxu0 0.0
  %44 = vmatpush.msra.mxu0 0.0
  %45 = vmatpush.msra.mxu0 0.0
  %46 = vmatpush.msra.mxu0 0.0
  %47 = vmatpush.msra.mxu0 0.0
  %48 = vmatpush.msra.mxu0 0.0
  %49 = vmatpush.msra.mxu0 0.0
  %50 = vmatpush.msra.mxu0 0.0
  %51 = vmatpush.msra.mxu0 0.0
  %v52 = vand.u32 %v16, 4294901760
  %53 = vmatpush.msra.mxu0 %v52
  %v54 = vand.u32 %v15, 4294901760
  %55 = vmatpush.msra.mxu0 %v54
  %v56 = vand.u32 %v14, 4294901760
  %57 = vmatpush.msra.mxu0 %v56
  %v58 = vand.u32 %v13, 4294901760
  %59 = vmatpush.msra.mxu0 %v58
  %v60 = vand.u32 %v12, 4294901760
  %61 = vmatpush.msra.mxu0 %v60
  %v62 = vand.u32 %v11, 4294901760
  %63 = vmatpush.msra.mxu0 %v62
  %v64 = vand.u32 %v25, 4294901760
  %v65 = vsub.f32 %v25, %v64
  %v66 = vand.u32 %v65, 4294901760
  %v67 = vsub.f32 %v65, %v66
  %v68 = vand.u32 %v67, 4294901760
  %69 = vmatmul.f32.gmra.mxu0 %v68
  %v70 = vpop.f32.mrf.mxu0
  %v71 = vadd.f32 0.0, %v70
  %v72 = vand.u32 %v28, 4294901760
  %v73 = vsub.f32 %v28, %v72
  %v74 = vand.u32 %v73, 4294901760
  %v75 = vsub.f32 %v73, %v74
  %v76 = vand.u32 %v75, 4294901760
  %77 = vmatmul.f32.gmra.mxu0 %v76
  %v78 = vpop.f32.mrf.mxu0
  %v79 = vadd.f32 0.0, %v78
  %v80 = vand.u32 %v31, 4294901760
  %v81 = vsub.f32 %v31, %v80
  %v82 = vand.u32 %v81, 4294901760
  %v83 = vsub.f32 %v81, %v82
  %v84 = vand.u32 %v83, 4294901760
  %85 = vmatmul.f32.gmra.mxu0 %v84
  %v86 = vpop.f32.mrf.mxu0
  %v87 = vadd.f32 0.0, %v86
  %v88 = vand.u32 %v34, 4294901760
  %v89 = vsub.f32 %v34, %v88
  %v90 = vand.u32 %v89, 4294901760
  %v91 = vsub.f32 %v89, %v90
  %v92 = vand.u32 %v91, 4294901760
  %93 = vmatmul.f32.gmra.mxu0 %v92
  %v94 = vpop.f32.mrf.mxu0
  %v95 = vadd.f32 0.0, %v94
  %v96 = vand.u32 %v37, 4294901760
  %v97 = vsub.f32 %v37, %v96
  %v98 = vand.u32 %v97, 4294901760
  %v99 = vsub.f32 %v97, %v98
  %v100 = vand.u32 %v99, 4294901760
  %101 = vmatmul.f32.gmra.mxu0 %v100
  %v102 = vpop.f32.mrf.mxu0
  %v103 = vadd.f32 0.0, %v102
  %v104 = vand.u32 %v40, 4294901760
  %v105 = vsub.f32 %v40, %v104
  %v106 = vand.u32 %v105, 4294901760
  %v107 = vsub.f32 %v105, %v106
  %v108 = vand.u32 %v107, 4294901760
  %109 = vmatmul.f32.gmra.mxu0 %v108
  %v110 = vpop.f32.mrf.mxu0
  %v111 = vadd.f32 0.0, %v110
  %112 = vdwg.mxu0
  %113 = vmatpush.msra.mxu0 0.0
  %114 = vmatpush.msra.mxu0 0.0
  %115 = vmatpush.msra.mxu0 0.0
  %116 = vmatpush.msra.mxu0 0.0
  %117 = vmatpush.msra.mxu0 0.0
  %118 = vmatpush.msra.mxu0 0.0
  %119 = vmatpush.msra.mxu0 0.0
  %120 = vmatpush.msra.mxu0 0.0
  %121 = vmatpush.msra.mxu0 0.0
  %122 = vmatpush.msra.mxu0 0.0
  %v123 = vand.u32 %v16, 4294901760
  %v124 = vsub.f32 %v16, %v123
  %v125 = vand.u32 %v124, 4294901760
  %v126 = vsub.f32 %v124, %v125
  %v127 = vand.u32 %v126, 4294901760
  %128 = vmatpush.msra.mxu0 %v127
  %v129 = vand.u32 %v15, 4294901760
  %v130 = vsub.f32 %v15, %v129
  %v131 = vand.u32 %v130, 4294901760
  %v132 = vsub.f32 %v130, %v131
  %v133 = vand.u32 %v132, 4294901760
  %134 = vmatpush.msra.mxu0 %v133
  %v135 = vand.u32 %v14, 4294901760
  %v136 = vsub.f32 %v14, %v135
  %v137 = vand.u32 %v136, 4294901760
  %v138 = vsub.f32 %v136, %v137
  %v139 = vand.u32 %v138, 4294901760
  %140 = vmatpush.msra.mxu0 %v139
  %v141 = vand.u32 %v13, 4294901760
  %v142 = vsub.f32 %v13, %v141
  %v143 = vand.u32 %v142, 4294901760
  %v144 = vsub.f32 %v142, %v143
  %v145 = vand.u32 %v144, 4294901760
  %146 = vmatpush.msra.mxu0 %v145
  %v147 = vand.u32 %v12, 4294901760
  %v148 = vsub.f32 %v12, %v147
  %v149 = vand.u32 %v148, 4294901760
  %v150 = vsub.f32 %v148, %v149
  %v151 = vand.u32 %v150, 4294901760
  %152 = vmatpush.msra.mxu0 %v151
  %v153 = vand.u32 %v11, 4294901760
  %v154 = vsub.f32 %v11, %v153
  %v155 = vand.u32 %v154, 4294901760
  %v156 = vsub.f32 %v154, %v155
  %v157 = vand.u32 %v156, 4294901760
  %158 = vmatpush.msra.mxu0 %v157
  %v159 = vand.u32 %v25, 4294901760
  %160 = vmatmul.f32.gmra.mxu0 %v159
  %v161 = vpop.f32.mrf.mxu0
  %v162 = vadd.f32 %v71, %v161
  %v163 = vand.u32 %v28, 4294901760
  %164 = vmatmul.f32.gmra.mxu0 %v163
  %v165 = vpop.f32.mrf.mxu0
  %v166 = vadd.f32 %v79, %v165
  %v167 = vand.u32 %v31, 4294901760
  %168 = vmatmul.f32.gmra.mxu0 %v167
  %v169 = vpop.f32.mrf.mxu0
  %v170 = vadd.f32 %v87, %v169
  %v171 = vand.u32 %v34, 4294901760
  %172 = vmatmul.f32.gmra.mxu0 %v171
  %v173 = vpop.f32.mrf.mxu0
  %v174 = vadd.f32 %v95, %v173
  %v175 = vand.u32 %v37, 4294901760
  %176 = vmatmul.f32.gmra.mxu0 %v175
  %v177 = vpop.f32.mrf.mxu0
  %v178 = vadd.f32 %v103, %v177
  %v179 = vand.u32 %v40, 4294901760
  %180 = vmatmul.f32.gmra.mxu0 %v179
  %v181 = vpop.f32.mrf.mxu0
  %v182 = vadd.f32 %v111, %v181
  %183 = vdwg.mxu0
  %184 = vmatpush.msra.mxu0 0.0
  %185 = vmatpush.msra.mxu0 0.0
  %186 = vmatpush.msra.mxu0 0.0
  %187 = vmatpush.msra.mxu0 0.0
  %188 = vmatpush.msra.mxu0 0.0
  %189 = vmatpush.msra.mxu0 0.0
  %190 = vmatpush.msra.mxu0 0.0
  %191 = vmatpush.msra.mxu0 0.0
  %192 = vmatpush.msra.mxu0 0.0
  %193 = vmatpush.msra.mxu0 0.0
  %v194 = vand.u32 %v16, 4294901760
  %v195 = vsub.f32 %v16, %v194
  %196 = vmatpush.msra.mxu0 %v195
  %v197 = vand.u32 %v15, 4294901760
  %v198 = vsub.f32 %v15, %v197
  %199 = vmatpush.msra.mxu0 %v198
  %v200 = vand.u32 %v14, 4294901760
  %v201 = vsub.f32 %v14, %v200
  %202 = vmatpush.msra.mxu0 %v201
  %v203 = vand.u32 %v13, 4294901760
  %v204 = vsub.f32 %v13, %v203
  %205 = vmatpush.msra.mxu0 %v204
  %v206 = vand.u32 %v12, 4294901760
  %v207 = vsub.f32 %v12, %v206
  %208 = vmatpush.msra.mxu0 %v207
  %v209 = vand.u32 %v11, 4294901760
  %v210 = vsub.f32 %v11, %v209
  %211 = vmatpush.msra.mxu0 %v210
  %v212 = vand.u32 %v25, 4294901760
  %v213 = vsub.f32 %v25, %v212
  %214 = vmatmul.f32.gmra.mxu0 %v213
  %v215 = vpop.f32.mrf.mxu0
  %v216 = vadd.f32 %v162, %v215
  %v217 = vand.u32 %v28, 4294901760
  %v218 = vsub.f32 %v28, %v217
  %219 = vmatmul.f32.gmra.mxu0 %v218
  %v220 = vpop.f32.mrf.mxu0
  %v221 = vadd.f32 %v166, %v220
  %v222 = vand.u32 %v31, 4294901760
  %v223 = vsub.f32 %v31, %v222
  %224 = vmatmul.f32.gmra.mxu0 %v223
  %v225 = vpop.f32.mrf.mxu0
  %v226 = vadd.f32 %v170, %v225
  %v227 = vand.u32 %v34, 4294901760
  %v228 = vsub.f32 %v34, %v227
  %229 = vmatmul.f32.gmra.mxu0 %v228
  %v230 = vpop.f32.mrf.mxu0
  %v231 = vadd.f32 %v174, %v230
  %v232 = vand.u32 %v37, 4294901760
  %v233 = vsub.f32 %v37, %v232
  %234 = vmatmul.f32.gmra.mxu0 %v233
  %v235 = vpop.f32.mrf.mxu0
  %v236 = vadd.f32 %v178, %v235
  %v237 = vand.u32 %v40, 4294901760
  %v238 = vsub.f32 %v40, %v237
  %239 = vmatmul.f32.gmra.mxu0 %v238
  %v240 = vpop.f32.mrf.mxu0
  %v241 = vadd.f32 %v182, %v240
  %242 = vdwg.mxu0
  %243 = vmatpush.msra.mxu0 0.0
  %244 = vmatpush.msra.mxu0 0.0
  %245 = vmatpush.msra.mxu0 0.0
  %246 = vmatpush.msra.mxu0 0.0
  %247 = vmatpush.msra.mxu0 0.0
  %248 = vmatpush.msra.mxu0 0.0
  %249 = vmatpush.msra.mxu0 0.0
  %250 = vmatpush.msra.mxu0 0.0
  %251 = vmatpush.msra.mxu0 0.0
  %252 = vmatpush.msra.mxu0 0.0
  %v253 = vand.u32 %v16, 4294901760
  %254 = vmatpush.msra.mxu0 %v253
  %v255 = vand.u32 %v15, 4294901760
  %256 = vmatpush.msra.mxu0 %v255
  %v257 = vand.u32 %v14, 4294901760
  %258 = vmatpush.msra.mxu0 %v257
  %v259 = vand.u32 %v13, 4294901760
  %260 = vmatpush.msra.mxu0 %v259
  %v261 = vand.u32 %v12, 4294901760
  %262 = vmatpush.msra.mxu0 %v261
  %v263 = vand.u32 %v11, 4294901760
  %264 = vmatpush.msra.mxu0 %v263
  %v265 = vand.u32 %v25, 4294901760
  %v266 = vsub.f32 %v25, %v265
  %v267 = vand.u32 %v266, 4294901760
  %268 = vmatmul.f32.gmra.mxu0 %v267
  %v269 = vpop.f32.mrf.mxu0
  %v270 = vadd.f32 %v216, %v269
  %v271 = vand.u32 %v28, 4294901760
  %v272 = vsub.f32 %v28, %v271
  %v273 = vand.u32 %v272, 4294901760
  %274 = vmatmul.f32.gmra.mxu0 %v273
  %v275 = vpop.f32.mrf.mxu0
  %v276 = vadd.f32 %v221, %v275
  %v277 = vand.u32 %v31, 4294901760
  %v278 = vsub.f32 %v31, %v277
  %v279 = vand.u32 %v278, 4294901760
  %280 = vmatmul.f32.gmra.mxu0 %v279
  %v281 = vpop.f32.mrf.mxu0
  %v282 = vadd.f32 %v226, %v281
  %v283 = vand.u32 %v34, 4294901760
  %v284 = vsub.f32 %v34, %v283
  %v285 = vand.u32 %v284, 4294901760
  %286 = vmatmul.f32.gmra.mxu0 %v285
  %v287 = vpop.f32.mrf.mxu0
  %v288 = vadd.f32 %v231, %v287
  %v289 = vand.u32 %v37, 4294901760
  %v290 = vsub.f32 %v37, %v289
  %v291 = vand.u32 %v290, 4294901760
  %292 = vmatmul.f32.gmra.mxu0 %v291
  %v293 = vpop.f32.mrf.mxu0
  %v294 = vadd.f32 %v236, %v293
  %v295 = vand.u32 %v40, 4294901760
  %v296 = vsub.f32 %v40, %v295
  %v297 = vand.u32 %v296, 4294901760
  %298 = vmatmul.f32.gmra.mxu0 %v297
  %v299 = vpop.f32.mrf.mxu0
  %v300 = vadd.f32 %v241, %v299
  %301 = vdwg.mxu0
  %302 = vmatpush.msra.mxu0 0.0
  %303 = vmatpush.msra.mxu0 0.0
  %304 = vmatpush.msra.mxu0 0.0
  %305 = vmatpush.msra.mxu0 0.0
  %306 = vmatpush.msra.mxu0 0.0
  %307 = vmatpush.msra.mxu0 0.0
  %308 = vmatpush.msra.mxu0 0.0
  %309 = vmatpush.msra.mxu0 0.0
  %310 = vmatpush.msra.mxu0 0.0
  %311 = vmatpush.msra.mxu0 0.0
  %v312 = vand.u32 %v16, 4294901760
  %v313 = vsub.f32 %v16, %v312
  %v314 = vand.u32 %v313, 4294901760
  %315 = vmatpush.msra.mxu0 %v314
  %v316 = vand.u32 %v15, 4294901760
  %v317 = vsub.f32 %v15, %v316
  %v318 = vand.u32 %v317, 4294901760
  %319 = vmatpush.msra.mxu0 %v318
  %v320 = vand.u32 %v14, 4294901760
  %v321 = vsub.f32 %v14, %v320
  %v322 = vand.u32 %v321, 4294901760
  %323 = vmatpush.msra.mxu0 %v322
  %v324 = vand.u32 %v13, 4294901760
  %v325 = vsub.f32 %v13, %v324
  %v326 = vand.u32 %v325, 4294901760
  %327 = vmatpush.msra.mxu0 %v326
  %v328 = vand.u32 %v12, 4294901760
  %v329 = vsub.f32 %v12, %v328
  %v330 = vand.u32 %v329, 4294901760
  %331 = vmatpush.msra.mxu0 %v330
  %v332 = vand.u32 %v11, 4294901760
  %v333 = vsub.f32 %v11, %v332
  %v334 = vand.u32 %v333, 4294901760
  %335 = vmatpush.msra.mxu0 %v334
  %v336 = vand.u32 %v25, 4294901760
  %337 = vmatmul.f32.gmra.mxu0 %v336
  %v338 = vpop.f32.mrf.mxu0
  %v339 = vadd.f32 %v270, %v338
  %v340 = vand.u32 %v28, 4294901760
  %341 = vmatmul.f32.gmra.mxu0 %v340
  %v342 = vpop.f32.mrf.mxu0
  %v343 = vadd.f32 %v276, %v342
  %v344 = vand.u32 %v31, 4294901760
  %345 = vmatmul.f32.gmra.mxu0 %v344
  %v346 = vpop.f32.mrf.mxu0
  %v347 = vadd.f32 %v282, %v346
  %v348 = vand.u32 %v34, 4294901760
  %349 = vmatmul.f32.gmra.mxu0 %v348
  %v350 = vpop.f32.mrf.mxu0
  %v351 = vadd.f32 %v288, %v350
  %v352 = vand.u32 %v37, 4294901760
  %353 = vmatmul.f32.gmra.mxu0 %v352
  %v354 = vpop.f32.mrf.mxu0
  %v355 = vadd.f32 %v294, %v354
  %v356 = vand.u32 %v40, 4294901760
  %357 = vmatmul.f32.gmra.mxu0 %v356
  %v358 = vpop.f32.mrf.mxu0
  %v359 = vadd.f32 %v300, %v358
  %360 = vdwg.mxu0
  %361 = vmatpush.msra.mxu0 0.0
  %362 = vmatpush.msra.mxu0 0.0
  %363 = vmatpush.msra.mxu0 0.0
  %364 = vmatpush.msra.mxu0 0.0
  %365 = vmatpush.msra.mxu0 0.0
  %366 = vmatpush.msra.mxu0 0.0
  %367 = vmatpush.msra.mxu0 0.0
  %368 = vmatpush.msra.mxu0 0.0
  %369 = vmatpush.msra.mxu0 0.0
  %370 = vmatpush.msra.mxu0 0.0
  %v371 = vand.u32 %v16, 4294901760
  %372 = vmatpush.msra.mxu0 %v371
  %v373 = vand.u32 %v15, 4294901760
  %374 = vmatpush.msra.mxu0 %v373
  %v375 = vand.u32 %v14, 4294901760
  %376 = vmatpush.msra.mxu0 %v375
  %v377 = vand.u32 %v13, 4294901760
  %378 = vmatpush.msra.mxu0 %v377
  %v379 = vand.u32 %v12, 4294901760
  %380 = vmatpush.msra.mxu0 %v379
  %v381 = vand.u32 %v11, 4294901760
  %382 = vmatpush.msra.mxu0 %v381
  %v383 = vand.u32 %v25, 4294901760
  %384 = vmatmul.f32.gmra.mxu0 %v383
  %v385 = vpop.f32.mrf.mxu0
  %v386 = vadd.f32 %v339, %v385
  %v387 = vand.u32 %v28, 4294901760
  %388 = vmatmul.f32.gmra.mxu0 %v387
  %v389 = vpop.f32.mrf.mxu0
  %v390 = vadd.f32 %v343, %v389
  %v391 = vand.u32 %v31, 4294901760
  %392 = vmatmul.f32.gmra.mxu0 %v391
  %v393 = vpop.f32.mrf.mxu0
  %v394 = vadd.f32 %v347, %v393
  %v395 = vand.u32 %v34, 4294901760
  %396 = vmatmul.f32.gmra.mxu0 %v395
  %v397 = vpop.f32.mrf.mxu0
  %v398 = vadd.f32 %v351, %v397
  %v399 = vand.u32 %v37, 4294901760
  %400 = vmatmul.f32.gmra.mxu0 %v399
  %v401 = vpop.f32.mrf.mxu0
  %v402 = vadd.f32 %v355, %v401
  %v403 = vand.u32 %v40, 4294901760
  %404 = vmatmul.f32.gmra.mxu0 %v403
  %v405 = vpop.f32.mrf.mxu0
  %v406 = vadd.f32 %v359, %v405
  %407 = vdwg.mxu0
  %v408 = vmul.f32 %v386, 0.04
  %v409 = vmul.f32 %v390, 0.04
  %v410 = vmul.f32 %v394, 0.04
  %v411 = vmul.f32 %v398, 0.04
  %v412 = vmul.f32 %v402, 0.04
  %v413 = vmul.f32 %v406, 0.04
  %vm414 = vcmask 130048
  %415 = vst.msk [vmem:[%s2] sm:$0xff] %vm414, %v408
  %416 = vst.msk [vmem:[%s2 + $0x8] sm:$0xff] %vm414, %v409
  %417 = vst.msk [vmem:[%s2 + $0x10] sm:$0xff] %vm414, %v410
  %418 = vst.msk [vmem:[%s2 + $0x18] sm:$0xff] %vm414, %v411
  %419 = vst.msk [vmem:[%s2 + $0x20] sm:$0xff] %vm414, %v412
  %420 = vst.msk [vmem:[%s2 + $0x28] sm:$0xff] %vm414, %v413
  // Predicated region
  $region10: #{tpu_custom_call.1} parent=0 // pred_check
    _
  $region11: #{tpu_custom_call.1} parent=0 // pred_check_branch
    %422 = sbr.rel (0) target = $region13
  $region12: #{tpu_custom_call.1} parent=0 // pred_region
    _
  $region13: #{tpu_custom_call.1} parent=0 // pred_fallthru
    _
  // Predicated region
  $region14: #{tpu_custom_call.1} parent=0 // pred_check
    _
  $region15: #{tpu_custom_call.1} parent=0 // pred_check_branch
    %424 = sbr.rel (0) target = $region17
  $region16: #{tpu_custom_call.1} parent=0 // pred_region
    _
  $region17: #{tpu_custom_call.1} parent=0 // pred_fallthru
    _

</llo_original>
